<compile_context>
chip_gen: v7x
topology: tpu7x:2x2x1
jax: 0.10.0
libtpu: 0.0.40
codegen_flags: <defaults>
</compile_context>

<pallas_src>
import jax
import jax.numpy as jnp
from jax.experimental import pallas as pl
from jax.experimental.pallas import tpu as pltpu


def _vdrop_kernel(x_ref, mask_ref, o_ref):
    # x_ref / o_ref: (B_BLK, T_TILE, Hp) tiles; mask_ref: (B_BLK, 1, Hp) in
    # x.dtype.  The mask broadcasts over the time axis of the tile.
    o_ref[...] = x_ref[...] * mask_ref[...]


def _tpu_generation_params():
    """Chip-generation-aware tiling knobs (with safe fallbacks)."""
    kind = ""
    try:
        kind = jax.devices()[0].device_kind.lower()
    except Exception:
        kind = ""
    vmem_cap = None
    try:
        vmem_cap = int(getattr(pltpu.get_tpu_info(), "vmem_capacity_bytes", 0)) or None
    except Exception:
        vmem_cap = None

    if ("v7" in kind) or (vmem_cap is not None and vmem_cap <= (64 << 20)):
        # v7x: 64 MiB VMEM/TC, 2 TensorCores, ~3.2 TB/s HBM.  Bigger tiles to
        # amortize the ~0.35 us/step cost; make sure there are >=2 grid blocks.
        return {"target_tile_bytes": 6 << 20, "vmem_limit_bytes": 48 << 20,
                "min_parallel_blocks": 2}
    if "v5" in kind:
        # v5e: 16 MiB scoped-VMEM default; keep the working set modest and set
        # the limit explicitly so double-buffered in+out tiles always fit.
        return {"target_tile_bytes": 2 << 20, "vmem_limit_bytes": 32 << 20,
                "min_parallel_blocks": 1}
    # v6e (or unknown): 128 MiB physical VMEM, 1 TC, ~1.4 TB/s HBM.
    return {"target_tile_bytes": 4 << 20, "vmem_limit_bytes": 48 << 20,
            "min_parallel_blocks": 1}


def _pick_time_tile(T, max_rows):
    """Time-tile: full T if it fits, else a multiple of 8 <= max_rows,
    preferring an exact divisor of T (no ragged last block)."""
    if T <= max_rows or T <= 8:
        return T
    cap = min(T, max(8, (max_rows // 8) * 8))
    d = cap
    while d >= 8:
        if T % d == 0:
            if d >= max(8, cap // 2):
                return d
            break
        d -= 8
    return cap  # ragged last block; Pallas masks it correctly


def _pick_batch_block(B, max_b):
    """Batch block: prefer a divisor of B close to the byte-budget target."""
    max_b = int(max(1, min(B, max_b)))
    if max_b >= B:
        return B
    for d in range(max_b, 0, -1):
        if B % d == 0:
            if d >= max(1, max_b // 2):
                return d
            break
    return max_b


def _choose_tiles(B, T, Hp, itemsize, target_bytes, min_parallel_blocks):
    """Pick (B_BLK, T_TILE) so one x tile is ~target_bytes, lane-dense in Hp."""
    row_bytes = max(1, Hp * itemsize)  # one time step of one batch row
    t_max = max(1, target_bytes // row_bytes)
    t_tile = _pick_time_tile(T, t_max)
    b_max = max(1, target_bytes // max(1, t_tile * row_bytes))
    b_blk = _pick_batch_block(B, b_max)

    if min_parallel_blocks >= 2 and b_blk >= B and t_tile >= T:
        # Whole tensor fits in one tile: split so both v7x TensorCores get work
        # (a single-block grid would leave one TC idle and halve HBM bandwidth).
        if B >= 2:
            b_blk = _pick_batch_block(B, max(1, B // 2))
        elif T >= 16:
            t_tile = _pick_time_tile(T, max(8, T // 2))
        # else: tensor is too small to split cleanly; leave as a single tile.
    return int(b_blk), int(t_tile)


def variational_dropout(x, key, dropout_rate, training=True, *,
                        donate_x=False, min_pallas_bytes=256 * 1024):
    """Pallas implementation of VariationalDropout.forward.

    x: (B, T, H) array.  key: jax PRNG key used to sample the per-(B, H) mask.
    Returns an array of the same shape/dtype.
    """
    if (not training) or dropout_rate == 0.0:
        return x

    B, T, H = x.shape
    keep = 1.0 - float(dropout_rate)
    itemsize = jnp.dtype(x.dtype).itemsize

    # Per-(batch, hidden) keep mask, shared across time, pre-scaled by 1/keep.
    # Sampled in the wrapper (tiny: B*H values); the kernel only does the
    # HBM-bandwidth-bound broadcast-multiply.  Mask is cast to x.dtype so the
    # kernel multiplies natively (no f32 round trip / extra vreg pressure).
    mask = (jax.random.bernoulli(key, keep, (B, 1, H)).astype(x.dtype)
            * jnp.asarray(1.0 / keep, dtype=x.dtype))

    # Tiny tensors: pallas_call launch + DMA setup dominates; let XLA fuse it.
    if B * T * H * itemsize < min_pallas_bytes:
        return x * mask

    params = _tpu_generation_params()

    # Lane-dense output: pad H to a multiple of 128 so output stores are full
    # unmasked vst (the biggest single lever for this mem-bound kernel).
    Hp = ((H + 127) // 128) * 128
    padded = Hp != H
    if padded:
        x_in = jnp.pad(x, ((0, 0), (0, 0), (0, Hp - H)))
        mask_in = jnp.pad(mask, ((0, 0), (0, 0), (0, Hp - H)))
    else:
        x_in, mask_in = x, mask

    b_blk, t_tile = _choose_tiles(B, T, Hp, itemsize,
                                  params["target_tile_bytes"],
                                  params["min_parallel_blocks"])
    grid = (pl.cdiv(B, b_blk), pl.cdiv(T, t_tile))

    # Dropout is safely computable in place: alias x to the output when the
    # input slab is a fresh wrapper-internal array (padded path) or the caller
    # explicitly donates x.
    alias = {0: 0} if (donate_x or padded) else {}

    out = pl.pallas_call(
        _vdrop_kernel,
        out_shape=jax.ShapeDtypeStruct((B, T, Hp), x.dtype),
        grid_spec=pl.GridSpec(
            grid=grid,
            # Grid order (B-blocks outer, T-blocks inner) with a ti-invariant
            # mask index_map keeps the mask tile resident across the fast axis
            # (no re-DMA per T step).  Do not swap the grid axes.
            in_specs=[
                pl.BlockSpec((b_blk, t_tile, Hp), lambda bi, ti: (bi, ti, 0)),
                pl.BlockSpec((b_blk, 1, Hp), lambda bi, ti: (bi, 0, 0)),
            ],
            out_specs=pl.BlockSpec((b_blk, t_tile, Hp), lambda bi, ti: (bi, ti, 0)),
        ),
        compiler_params=pltpu.CompilerParams(
            dimension_semantics=("parallel", "parallel"),
            vmem_limit_bytes=params["vmem_limit_bytes"],
        ),
        input_output_aliases=alias,
    )(x_in, mask_in)

    if padded:
        out = out[:, :, :H]
    return out


def _check_mask_semantics(x, out, keep):
    # Per-(batch, hidden) mask, constant across time, values in {0, 1/keep}.
    ratio = out / x  # x ~ N(0,1), effectively never exactly zero
    mask0 = ratio[:, 0:1, :]
    assert bool(jnp.allclose(ratio, jnp.broadcast_to(mask0, ratio.shape), atol=1e-5))
    is_zero = jnp.isclose(mask0, 0.0, atol=1e-5)
    is_scale = jnp.isclose(mask0, 1.0 / keep, atol=1e-5)
    assert bool(jnp.all(is_zero | is_scale))


if __name__ == "__main__":
    dropout_rate = 0.25
    keep = 1.0 - dropout_rate

    root = jax.random.PRNGKey(0)
    data_key, mask_key, data_key2, mask_key2 = jax.random.split(root, 4)

    # Case 1: H already a multiple of 128 (lane-dense, no padding path).
    B, T, H = 4, 16, 256
    x = jax.random.normal(data_key, (B, T, H), dtype=jnp.float32)
    out = variational_dropout(x, mask_key, dropout_rate, training=True,
                              min_pallas_bytes=0)  # force the Pallas path
    out = jax.block_until_ready(out)
    assert out.shape == x.shape and out.dtype == x.dtype
    _check_mask_semantics(x, out, keep)

    # Donated / in-place variant produces the same result (same mask key).
    out_donated = variational_dropout(x.copy(), mask_key, dropout_rate,
                                      training=True, donate_x=True,
                                      min_pallas_bytes=0)
    out_donated = jax.block_until_ready(out_donated)
    assert bool(jnp.allclose(out, out_donated, atol=1e-6))

    # Tiny-tensor fast path (default threshold) agrees with the kernel path.
    out_fast = variational_dropout(x, mask_key, dropout_rate, training=True)
    assert bool(jnp.allclose(out, out_fast, atol=1e-6))

    # Eval mode is identity.
    out_eval = variational_dropout(x, mask_key, dropout_rate, training=False)
    assert bool(jnp.array_equal(out_eval, x))

    # Case 2: real BiLSTM-like hidden size (H % 128 != 0) exercises the
    # pad-to-lane-dense path.
    B2, T2, H2 = 4, 16, 300
    x2 = jax.random.normal(data_key2, (B2, T2, H2), dtype=jnp.float32)
    out2 = variational_dropout(x2, mask_key2, dropout_rate, training=True,
                               min_pallas_bytes=0)
    out2 = jax.block_until_ready(out2)
    assert out2.shape == x2.shape and out2.dtype == x2.dtype
    _check_mask_semantics(x2, out2, keep)

    print("KERNEL_OK")
</pallas_src>

<mosaic_0001>
module attributes {stable_mosaic.version = 11 : i64} {
  func.func @_vdrop_kernel(%arg0: i32, %arg1: i32, %arg2: memref<4x16x256xf32, #tpu.memory_space<vmem>>, %arg3: memref<4x1x256xf32, #tpu.memory_space<vmem>>, %arg4: memref<4x16x256xf32, #tpu.memory_space<vmem>>) attributes {dimension_semantics = [#tpu.dimension_semantics<parallel>, #tpu.dimension_semantics<parallel>], iteration_bounds = array<i64: 1, 1>, scalar_prefetch = 0 : i64, scratch_operands = 0 : i64, tpu.core_type = #tpu.core_type<tc>, window_params = [{transform_indices = @transform_0, window_bounds = array<i64: 4, 16, 256>}, {transform_indices = @transform_1, window_bounds = array<i64: 4, 1, 256>}, {transform_indices = @transform_2, window_bounds = array<i64: 4, 16, 256>}]} {
    %c0 = arith.constant 0 : index
    %c0_0 = arith.constant 0 : index
    %c0_1 = arith.constant 0 : index
    %0 = vector.load %arg2[%c0, %c0_0, %c0_1] : memref<4x16x256xf32, #tpu.memory_space<vmem>>, vector<4x16x256xf32>
    %c0_2 = arith.constant 0 : index
    %c0_3 = arith.constant 0 : index
    %c0_4 = arith.constant 0 : index
    %1 = vector.load %arg3[%c0_2, %c0_3, %c0_4] : memref<4x1x256xf32, #tpu.memory_space<vmem>>, vector<4x1x256xf32>
    %2 = vector.broadcast %1 : vector<4x1x256xf32> to vector<4x16x256xf32>
    %3 = arith.mulf %0, %2 : vector<4x16x256xf32>
    %c0_5 = arith.constant 0 : index
    %c0_6 = arith.constant 0 : index
    %c0_7 = arith.constant 0 : index
    %4 = vector.load %arg4[%c0_5, %c0_6, %c0_7] : memref<4x16x256xf32, #tpu.memory_space<vmem>>, vector<4x16x256xf32>
    tpu.vector_store %arg4[%c0_5, %c0_6, %c0_7], %3 {strides = array<i32>} : memref<4x16x256xf32, #tpu.memory_space<vmem>>, vector<4x16x256xf32>,
    return
  }
  func.func @transform_0(%arg0: i32, %arg1: i32) -> (i32, i32, i32) {
    %c0_i32 = arith.constant 0 : i32
    %c0_i32_0 = arith.constant 0 : i32
    return %arg0, %arg1, %c0_i32 : i32, i32, i32
  }
  func.func @transform_1(%arg0: i32, %arg1: i32) -> (i32, i32, i32) {
    %c0_i32 = arith.constant 0 : i32
    %c0_i32_0 = arith.constant 0 : i32
    %c0_i32_1 = arith.constant 0 : i32
    return %arg0, %c0_i32, %c0_i32_0 : i32, i32, i32
  }
  func.func @transform_2(%arg0: i32, %arg1: i32) -> (i32, i32, i32) {
    %c0_i32 = arith.constant 0 : i32
    %c0_i32_0 = arith.constant 0 : i32
    return %arg0, %arg1, %c0_i32 : i32, i32, i32
  }
}

</mosaic_0001>

<llo_original>
// kernel: tpu_custom_call.1
$region0: #{tpu_custom_call.1}
  #allocation0 [shape = 'u32[]', space=smem, size = 0x4, offset = 0x4, fixed_abs, tag = 'smem constant byte address 0x4 - core index']
  #allocation1 [shape = 'u32[144,128]{1,0:T(1,128)}', space=vmem, size = 0x12000, scoped, tag = 'internal scratch']
  %s0 = inlined_call_operand.hbm [shape: f32[4,16,256], index: 0, kind: input, shape index: {}]
  %s1 = inlined_call_operand.hbm [shape: f32[4,1,256], index: 1, kind: input, shape index: {}]
  %s2 = inlined_call_operand.hbm [shape: f32[4,16,256], index: 2, kind: output, shape index: {}]
  %s3 = sld [smem:[#allocation0]]
  $region26: #{tpu_custom_call.1} parent=0
    _
  %s5 = ssub.s32 1, %s3
  %s6 = scalar_select 0, %s5, %s3
  $region1: #{tpu_custom_call.1} parent=0
    #allocation2 [shape = 'u8[65536]{0}', space=vmem, size = 0x10000, scoped, tag = 'input window, operand 0, single buffered']
    #allocation3 [shape = 's32[1]{0}', space=sflag, size = 0x4, scoped, tag = 'scoped memory for tpu_custom_call.1']
    #allocation4 [shape = 's32[1]{0}', space=sflag, size = 0x4, scoped, tag = 'scoped memory for tpu_custom_call.1']
    #allocation5 [shape = 'u8[4096]{0}', space=vmem, size = 0x1000, scoped, tag = 'input window, operand 1, single buffered']
    #allocation6 [shape = 's32[1]{0}', space=sflag, size = 0x4, scoped, tag = 'scoped memory for tpu_custom_call.1']
    #allocation7 [shape = 'u8[65536]{0}', space=vmem, size = 0x10000, scoped, tag = 'output window, operand 0, single buffered']
    %7 = vsyncpa [#allocation3], 0
    %8 = vsyncpa [#allocation6], 0
    %9 = vsyncpa [#allocation4], 0
    // Predicated region
    $region2: #{tpu_custom_call.1} parent=1 // pred_check
      _
    $region3: #{tpu_custom_call.1} parent=1 // pred_check_branch
      %11 = sbr.rel (0) target = $region5
    $region4: #{tpu_custom_call.1} parent=1 // pred_region
      %s13 = ssub.s32 2048, 2048
      %14 = vsyncadd [#allocation3], %s13
      %s15 = sshll.u32 [#allocation2], 4
      %s16 = int_to_ptr.vmem [resolvable:$true] %s15
      %21 = dma.hbm_to_vmem [thread:$0]  %s0, 2048, %s16, [#allocation3], 256, 256, 16
    $region5: #{tpu_custom_call.1} parent=1 // pred_fallthru
      _
    // Predicated region
    $region6: #{tpu_custom_call.1} parent=1 // pred_check
      _
    $region7: #{tpu_custom_call.1} parent=1 // pred_check_branch
      %23 = sbr.rel (0) target = $region9
    $region8: #{tpu_custom_call.1} parent=1 // pred_region
      %s25 = ssub.s32 128, 128
      %26 = vsyncadd [#allocation6], %s25
      %s27 = sshll.u32 [#allocation5], 4
      %s28 = int_to_ptr.vmem [resolvable:$true] %s27
      %33 = dma.hbm_to_vmem [thread:$0]  %s1, 128, %s28, [#allocation6], 32, 32, 2
    $region9: #{tpu_custom_call.1} parent=1 // pred_fallthru
      _
    // Predicated region
    $region10: #{tpu_custom_call.1} parent=1 // pred_check
      _
    $region11: #{tpu_custom_call.1} parent=1 // pred_check_branch
      %35 = sbr.rel (0) target = $region13
    $region12: #{tpu_custom_call.1} parent=1 // pred_region
      %36 = dma.done [#allocation3], 2048
    $region13: #{tpu_custom_call.1} parent=1 // pred_fallthru
      _
    // Predicated region
    $region14: #{tpu_custom_call.1} parent=1 // pred_check
      _
    $region15: #{tpu_custom_call.1} parent=1 // pred_check_branch
      %38 = sbr.rel (0) target = $region17
    $region16: #{tpu_custom_call.1} parent=1 // pred_region
      %39 = dma.done [#allocation6], 128
    $region17: #{tpu_custom_call.1} parent=1 // pred_fallthru
      _
    %v40 = vld [vmem:[#allocation2] sm:$0xff]
    %v41 = vld [vmem:[#allocation2 + $0x8] sm:$0xff]
    %v42 = vld [vmem:[#allocation2 + $0x10] sm:$0xff]
    %v43 = vld [vmem:[#allocation2 + $0x18] sm:$0xff]
    %v44 = vld [vmem:[#allocation2 + $0x20] sm:$0xff]
    %v45 = vld [vmem:[#allocation2 + $0x28] sm:$0xff]
    %v46 = vld [vmem:[#allocation2 + $0x30] sm:$0xff]
    %v47 = vld [vmem:[#allocation2 + $0x38] sm:$0xff]
    %v48 = vld [vmem:[#allocation2 + $0x40] sm:$0xff]
    %v49 = vld [vmem:[#allocation2 + $0x48] sm:$0xff]
    %v50 = vld [vmem:[#allocation2 + $0x50] sm:$0xff]
    %v51 = vld [vmem:[#allocation2 + $0x58] sm:$0xff]
    %v52 = vld [vmem:[#allocation2 + $0x60] sm:$0xff]
    %v53 = vld [vmem:[#allocation2 + $0x68] sm:$0xff]
    %v54 = vld [vmem:[#allocation2 + $0x70] sm:$0xff]
    %v55 = vld [vmem:[#allocation2 + $0x78] sm:$0xff]
    %v56 = vld [vmem:[#allocation5] sm:$0x3]
    %v57 = vld [vmem:[#allocation5 + $0x2] sm:$0x3]
    %v58 = vld [vmem:[#allocation5 + $0x4] sm:$0x3]
    %v59 = vld [vmem:[#allocation5 + $0x6] sm:$0x3]
    %v64 = vlaneseq
    %v65 = vshrl.u32 %v64, 7
    %v66 = vsub.s32 0, %v65
    %v67 = vrot.slane %v56, %v66
    %v68 = vlaneseq
    %v69 = vshrl.u32 %v68, 7
    %v70 = vsub.s32 1, %v69
    %v71 = vrot.slane %v56, %v70
    %v72 = vlaneseq
    %v73 = vshrl.u32 %v72, 7
    %v74 = vsub.s32 0, %v73
    %v75 = vrot.slane %v57, %v74
    %v76 = vlaneseq
    %v77 = vshrl.u32 %v76, 7
    %v78 = vsub.s32 1, %v77
    %v79 = vrot.slane %v57, %v78
    %v80 = vlaneseq
    %v81 = vshrl.u32 %v80, 7
    %v82 = vsub.s32 0, %v81
    %v83 = vrot.slane %v58, %v82
    %v84 = vlaneseq
    %v85 = vshrl.u32 %v84, 7
    %v86 = vsub.s32 1, %v85
    %v87 = vrot.slane %v58, %v86
    %v88 = vlaneseq
    %v89 = vshrl.u32 %v88, 7
    %v90 = vsub.s32 0, %v89
    %v91 = vrot.slane %v59, %v90
    %v92 = vlaneseq
    %v93 = vshrl.u32 %v92, 7
    %v94 = vsub.s32 1, %v93
    %v95 = vrot.slane %v59, %v94
    %v104 = vmul.f32 %v40, %v67
    %v105 = vmul.f32 %v41, %v71
    %v106 = vmul.f32 %v42, %v67
    %v107 = vmul.f32 %v43, %v71
    %v108 = vmul.f32 %v44, %v75
    %v109 = vmul.f32 %v45, %v79
    %v110 = vmul.f32 %v46, %v75
    %v111 = vmul.f32 %v47, %v79
    %v112 = vmul.f32 %v48, %v83
    %v113 = vmul.f32 %v49, %v87
    %v114 = vmul.f32 %v50, %v83
    %v115 = vmul.f32 %v51, %v87
    %v116 = vmul.f32 %v52, %v91
    %v117 = vmul.f32 %v53, %v95
    %v118 = vmul.f32 %v54, %v91
    %v119 = vmul.f32 %v55, %v95
    %120 = vst [vmem:[#allocation7] sm:$0xff] %v104
    %121 = vst [vmem:[#allocation7 + $0x8] sm:$0xff] %v105
    %122 = vst [vmem:[#allocation7 + $0x10] sm:$0xff] %v106
    %123 = vst [vmem:[#allocation7 + $0x18] sm:$0xff] %v107
    %124 = vst [vmem:[#allocation7 + $0x20] sm:$0xff] %v108
    %125 = vst [vmem:[#allocation7 + $0x28] sm:$0xff] %v109
    %126 = vst [vmem:[#allocation7 + $0x30] sm:$0xff] %v110
    %127 = vst [vmem:[#allocation7 + $0x38] sm:$0xff] %v111
    %128 = vst [vmem:[#allocation7 + $0x40] sm:$0xff] %v112
    %129 = vst [vmem:[#allocation7 + $0x48] sm:$0xff] %v113
    %130 = vst [vmem:[#allocation7 + $0x50] sm:$0xff] %v114
    %131 = vst [vmem:[#allocation7 + $0x58] sm:$0xff] %v115
    %132 = vst [vmem:[#allocation7 + $0x60] sm:$0xff] %v116
    %133 = vst [vmem:[#allocation7 + $0x68] sm:$0xff] %v117
    %134 = vst [vmem:[#allocation7 + $0x70] sm:$0xff] %v118
    %135 = vst [vmem:[#allocation7 + $0x78] sm:$0xff] %v119
    // Predicated region
    $region18: #{tpu_custom_call.1} parent=1 // pred_check
      _
    $region19: #{tpu_custom_call.1} parent=1 // pred_check_branch
      %137 = sbr.rel (0) target = $region21
    $region20: #{tpu_custom_call.1} parent=1 // pred_region
      %s139 = ssub.s32 2048, 2048
      %140 = vsyncadd [#allocation4], %s139
      %s141 = sshll.u32 [#allocation7], 4
      %s142 = int_to_ptr.vmem [resolvable:$true] %s141
      %147 = dma.vmem_to_hbm [thread:$0]  %s142, 2048, %s2, [#allocation4], 256, 256, 16
    $region21: #{tpu_custom_call.1} parent=1 // pred_fallthru
      _
    // Predicated region
    $region22: #{tpu_custom_call.1} parent=1 // pred_check
      _
    $region23: #{tpu_custom_call.1} parent=1 // pred_check_branch
      %149 = sbr.rel (0) target = $region25
    $region24: #{tpu_custom_call.1} parent=1 // pred_region
      %150 = dma.done [#allocation4], 2048
    $region25: #{tpu_custom_call.1} parent=1 // pred_fallthru
      _
    %151 = vsyncpa [#allocation3], 1
    %152 = vsyncpa [#allocation6], 1
    %153 = vsyncpa [#allocation4], 1

</llo_original>
